<compile_context>
chip_gen: v6e
topology: v6e:2x2x1
jax: 0.10.0
libtpu: 0.0.40
codegen_flags: <defaults>
</compile_context>

<pallas_src>
import jax
import jax.numpy as jnp
from jax.experimental import pallas as pl
from jax.experimental.pallas import tpu as pltpu

HIGH = jax.lax.Precision.HIGHEST


# ----------------------------------------------------------------------------
# VMEM budget / tiling helpers
# ----------------------------------------------------------------------------
def _vmem_limit_bytes():
    """Scoped-VMEM request derived from the chip (v5e/v6e: 64 MiB, v7x: 32 MiB)."""
    try:
        info = pltpu.get_tpu_info()
        phys = int(getattr(info, "vmem_capacity_bytes", 128 * 1024 * 1024))
    except Exception:
        phys = 128 * 1024 * 1024
    return int(min(phys // 2, 64 * 1024 * 1024))


def _largest_aligned_divisor(total, align, cap):
    """Largest multiple of `align` dividing `total` and <= cap (assumes align|total)."""
    cap = max(align, min(total, cap))
    best = align
    d = align
    while d <= cap:
        if total % d == 0:
            best = d
        d += align
    return best


def _pick_row_sub(tr):
    """Rows per register-resident accumulator sub-block (<= 8 vregs)."""
    for s in (64, 32, 16, 8):
        if tr % s == 0:
            return s
    return tr  # unreachable: tr is always a multiple of 8


# ----------------------------------------------------------------------------
# Kernel 1: pipelined GAP partial sums (lane-wide accumulator, VPU adds only).
# ----------------------------------------------------------------------------
def _make_pool_kernel(tr, n_lanes, row_sub):
    def kernel(x_ref, psum_ref):
        k = pl.program_id(1)

        @pl.when(k == 0)
        def _init():
            psum_ref[...] = jnp.zeros_like(psum_ref)

        # Accumulate 128-lane slices of this chunk with VPU adds into a small
        # register-resident partial, then fold into the resident output block.
        for r0 in range(0, tr, row_sub):
            part = x_ref[r0:r0 + row_sub, 0:128].astype(jnp.float32)
            for j in range(1, n_lanes):
                part = part + x_ref[r0:r0 + row_sub,
                                    j * 128:(j + 1) * 128].astype(jnp.float32)
            psum_ref[r0:r0 + row_sub, :] += part

    return kernel


# ----------------------------------------------------------------------------
# Kernel 2: lane-dense elementwise hot path — SE scale + rectangle drop mask.
# ----------------------------------------------------------------------------
def _make_apply_kernel(rh, rw):
    def kernel(x_ref, plane_ref, scal_ref, o_ref):
        x = x_ref[...]                                  # (1, tc, sp)
        planes = plane_ref[...]                         # (2, sp) int32
        rows = planes[0:1, :][None]                     # (1, 1, sp)
        cols = planes[1:2, :][None]                     # (1, 1, sp)
        scal = scal_ref[...]                            # (1, tc, 3) f32
        se = scal[:, :, 0:1]                            # (1, tc, 1)
        sx0 = scal[:, :, 1:2].astype(jnp.int32)         # integer-valued floats
        sy0 = scal[:, :, 2:3].astype(jnp.int32)
        # unsigned range-compare: rows in [sx0, sx0+rh) and cols in [sy0, sy0+rw)
        drop = (((rows - sx0).astype(jnp.uint32) < jnp.uint32(rh)) &
                ((cols - sy0).astype(jnp.uint32) < jnp.uint32(rw)))
        scaled = x * se.astype(x.dtype)                 # bf16 stays bf16, f32 stays f32
        o_ref[...] = jnp.where(drop, jnp.zeros((), scaled.dtype),
                               scaled).astype(o_ref.dtype)

    return kernel


# ----------------------------------------------------------------------------
# SE / conv_h,w / DyReLU / sigmoid / ceil / clamp epilogue on the tiny (B, C)
# pooled tensor — plain JAX (keeps all weights out of the Pallas VMEM budget).
# ----------------------------------------------------------------------------
def _se_dyrelu_epilogue(pooled, p, C, H, W, rh, rw):
    hid = jax.nn.relu(jnp.dot(pooled, p['w_se1'], precision=HIGH) + p['b_se1'])
    se = jax.nn.sigmoid(jnp.dot(hid, p['w_se2'], precision=HIGH) + p['b_se2'])
    # adaptive_avg_pool2d(x * se) == se * GAP(x) since se is constant over (H, W)
    g = se * pooled

    def head(wc, bc, w1, b1, w2, b2):
        f = jnp.dot(g, wc, precision=HIGH) + bc              # 1x1 conv on 1x1 map
        h1 = jax.nn.relu(jnp.dot(f, w1, precision=HIGH) + b1)
        hs = jnp.clip((jnp.dot(h1, w2, precision=HIGH) + b2 + 3.0) / 6.0,
                      0.0, 1.0)                               # HSigmoid(3, 6)
        co = hs - 0.5
        a1 = co[:, 0:C] * 2.0 + 1.0
        bb1 = co[:, C:2 * C]
        a2 = co[:, 2 * C:3 * C] * 2.0
        bb2 = co[:, 3 * C:4 * C]
        dy = jnp.maximum(f * a1 + bb1, f * a2 + bb2)          # DyReLU
        return jax.nn.sigmoid(dy)

    sxf = head(p['w_ch'], p['b_ch'], p['w_dh1'], p['b_dh1'], p['w_dh2'], p['b_dh2'])
    syf = head(p['w_cw'], p['b_cw'], p['w_dw1'], p['b_dw1'], p['w_dw2'], p['b_dw2'])
    # faithful to the PyTorch code: BOTH scaled by h; sy clamped to w - rw.
    sx = jnp.minimum(jnp.ceil(float(H) * sxf), float(H - rh))
    sy = jnp.minimum(jnp.ceil(float(H) * syf), float(W - rw))
    return se, sx, sy


# ----------------------------------------------------------------------------
# Wrapper
# ----------------------------------------------------------------------------
def feat_guide_batch_drop(x, params, h_ratio=0.05, w_ratio=0.1):
    B, C, H, W = x.shape
    HW = H * W
    rh = int(h_ratio * H)
    rw = int(w_ratio * W)
    itemsize = x.dtype.itemsize

    vmem_limit = _vmem_limit_bytes()
    pool_target = vmem_limit // 4    # x block double-buffered -> ~half the budget
    apply_target = vmem_limit // 8   # x + out blocks, both double-buffered

    # ---- pad spatial to a multiple of 128 (lanes) and channels to a multiple of 8 ----
    HWp = pl.cdiv(HW, 128) * 128
    Cp = pl.cdiv(C, 8) * 8
    x3 = x.reshape(B, C, HW)                 # free contiguous reshape (lane-dense)
    if (HWp != HW) or (Cp != C):
        x3p = jnp.pad(x3, ((0, 0), (0, Cp - C), (0, HWp - HW)))
    else:
        x3p = x3

    # ======================= Pass 1: pooled statistics ========================
    R = B * Cp
    x2 = x3p.reshape(R, HWp)                 # free reshape (merge leading dims)

    s_chunk = _largest_aligned_divisor(HWp, 128, 2048)       # bounded unroll (<=16 adds)
    n_lanes = s_chunk // 128
    tr_cap = min(512, max(8, pool_target // (s_chunk * itemsize)))
    if R >= 16:
        tr_cap = min(tr_cap, max(8, R // 2))                 # >=2 row tiles for megacore
    tr = _largest_aligned_divisor(R, 8, tr_cap)
    row_sub = _pick_row_sub(tr)
    n_chunks = HWp // s_chunk

    psum = pl.pallas_call(
        _make_pool_kernel(tr, n_lanes, row_sub),
        out_shape=jax.ShapeDtypeStruct((R, 128), jnp.float32),
        grid=(R // tr, n_chunks),
        in_specs=[pl.BlockSpec((tr, s_chunk), lambda r, k: (r, k))],
        out_specs=pl.BlockSpec((tr, 128), lambda r, k: (r, 0)),
        compiler_params=pltpu.CompilerParams(
            dimension_semantics=("parallel", "arbitrary"),
            vmem_limit_bytes=vmem_limit),
    )(x2)

    # single cross-lane reduce on a tiny tensor, then the SE/DyReLU epilogue (JAX)
    pooled = psum.sum(axis=-1).reshape(B, Cp)[:, :C] * (1.0 / float(HW))
    se, sx, sy = _se_dyrelu_epilogue(pooled, params, C, H, W, rh, rw)

    # pack per-channel scalars into ONE (B, Cp, 3) f32 side input
    scal = jnp.stack([se, sx, sy], axis=-1).astype(jnp.float32)     # (B, C, 3)
    if Cp != C:
        scal = jnp.pad(scal, ((0, 0), (0, Cp - C), (0, 0)))

    # precomputed row/col index planes, packed into one (2, HWp) input
    # (padded positions get rows >= H -> never inside the drop rectangle)
    idx = jnp.arange(HWp, dtype=jnp.int32)
    planes = jnp.stack([idx // W, idx % W])                          # (2, HWp) int32

    # ========================= Pass 2: apply ==================================
    sp_cap = max(128, apply_target // (8 * itemsize))
    sp_chunk = _largest_aligned_divisor(HWp, 128, sp_cap)
    tc_cap = max(8, apply_target // (sp_chunk * itemsize))
    tc = _largest_aligned_divisor(Cp, 8, tc_cap)

    x_spec = pl.BlockSpec((1, tc, sp_chunk), lambda b, c, s: (b, c, s))
    plane_spec = pl.BlockSpec((2, sp_chunk), lambda b, c, s: (0, s))
    scal_spec = pl.BlockSpec((1, tc, 3), lambda b, c, s: (b, c, 0))

    # NOTE: could add input_output_aliases={0: 0} to donate x3p when the caller
    # provably does not reuse x; left off here to stay safe for generic callers.
    out3 = pl.pallas_call(
        _make_apply_kernel(rh, rw),
        out_shape=jax.ShapeDtypeStruct((B, Cp, HWp), x.dtype),
        grid=(B, Cp // tc, HWp // sp_chunk),
        in_specs=[x_spec, plane_spec, scal_spec],
        out_specs=x_spec,
        compiler_params=pltpu.CompilerParams(
            dimension_semantics=("parallel", "parallel", "parallel"),
            vmem_limit_bytes=vmem_limit),
    )(x3p, planes, scal)

    if (HWp != HW) or (Cp != C):
        out3 = out3[:, :C, :HW]
    return out3.reshape(B, C, H, W)


# ----------------------------------------------------------------------------
# Deterministic synthetic parameters (PyTorch conv weights (out, in, 1, 1)
# stored transposed as (in, out); biases stored as (1, out)).
# ----------------------------------------------------------------------------
def init_params(key, C):
    Cse = max(int(C / 16), 1)   # SELayer reduction (ratio=16)
    Cd = max(int(C / 4), 1)     # DyReLU reduction (ratio=4)
    ks = jax.random.split(key, 16)

    def w(k, shape, scale=0.3):
        return scale * jax.random.normal(k, shape, dtype=jnp.float32)

    return {
        'w_se1': w(ks[0], (C, Cse)),   'b_se1': w(ks[1], (1, Cse)),
        'w_se2': w(ks[2], (Cse, C)),   'b_se2': w(ks[3], (1, C)),
        'w_ch':  w(ks[4], (C, C)),     'b_ch':  w(ks[5], (1, C)),
        'w_dh1': w(ks[6], (C, Cd)),    'b_dh1': w(ks[7], (1, Cd)),
        'w_dh2': w(ks[8], (Cd, 4 * C)), 'b_dh2': w(ks[9], (1, 4 * C)),
        'w_cw':  w(ks[10], (C, C)),    'b_cw':  w(ks[11], (1, C)),
        'w_dw1': w(ks[12], (C, Cd)),   'b_dw1': w(ks[13], (1, Cd)),
        'w_dw2': w(ks[14], (Cd, 4 * C)), 'b_dw2': w(ks[15], (1, 4 * C)),
    }


# ----------------------------------------------------------------------------
# Pure-JAX reference (same math as the PyTorch training branch).
# ----------------------------------------------------------------------------
def reference_forward(x, p, h_ratio=0.05, w_ratio=0.1):
    B, C, H, W = x.shape
    rh = int(h_ratio * H)
    rw = int(w_ratio * W)
    pooled = x.mean(axis=(2, 3))
    hid = jax.nn.relu(jnp.dot(pooled, p['w_se1'], precision=HIGH) + p['b_se1'])
    se = jax.nn.sigmoid(jnp.dot(hid, p['w_se2'], precision=HIGH) + p['b_se2'])
    xs = x * se[:, :, None, None]
    g = se * pooled  # == xs.mean((2,3)) since se is constant over (H, W)

    def head(wc, bc, w1, b1, w2, b2):
        f = jnp.dot(g, wc, precision=HIGH) + bc
        h1 = jax.nn.relu(jnp.dot(f, w1, precision=HIGH) + b1)
        hs = jnp.clip((jnp.dot(h1, w2, precision=HIGH) + b2 + 3.0) / 6.0, 0.0, 1.0)
        co = hs - 0.5
        a1 = co[:, :C] * 2.0 + 1.0
        b1_ = co[:, C:2 * C]
        a2 = co[:, 2 * C:3 * C] * 2.0
        b2_ = co[:, 3 * C:]
        return jax.nn.sigmoid(jnp.maximum(f * a1 + b1_, f * a2 + b2_))

    sx = jnp.minimum(jnp.ceil(H * head(p['w_ch'], p['b_ch'], p['w_dh1'],
                                       p['b_dh1'], p['w_dh2'], p['b_dh2'])), H - rh)
    sy = jnp.minimum(jnp.ceil(H * head(p['w_cw'], p['b_cw'], p['w_dw1'],
                                       p['b_dw1'], p['w_dw2'], p['b_dw2'])), W - rw)
    rows = jnp.arange(H)[None, None, :, None]
    cols = jnp.arange(W)[None, None, None, :]
    sx4 = sx[:, :, None, None]
    sy4 = sy[:, :, None, None]
    drop = (rows >= sx4) & (rows < sx4 + rh) & (cols >= sy4) & (cols < sy4 + rw)
    return jnp.where(drop, 0.0, xs)


if __name__ == "__main__":
    key = jax.random.PRNGKey(0)
    kx, kp = jax.random.split(key)
    B, C, H, W = 2, 32, 32, 32       # rh = int(0.05*32) = 1, rw = int(0.1*32) = 3
    x = jax.random.normal(kx, (B, C, H, W), dtype=jnp.float32)
    params = init_params(kp, C)

    out = jax.block_until_ready(feat_guide_batch_drop(x, params))
    ref = reference_forward(x, params)
    err = float(jnp.max(jnp.abs(out - ref)))
    assert out.shape == x.shape and out.dtype == x.dtype, (out.shape, out.dtype)
    # NOTE: ceil() boundaries are theoretically sensitive to GAP summation order;
    # deterministic PRNGKey(0) inputs keep this comparison stable.
    assert err < 5e-3, f"max abs err {err}"
    print("KERNEL_OK")
</pallas_src>

<mosaic_0001>
module attributes {stable_mosaic.version = 11 : i64} {
  func.func @kernel(%arg0: i32, %arg1: i32, %arg2: memref<32x1024xf32, #tpu.memory_space<vmem>>, %arg3: memref<32x128xf32, #tpu.memory_space<vmem>>) attributes {dimension_semantics = [#tpu.dimension_semantics<parallel>, #tpu.dimension_semantics<arbitrary>], iteration_bounds = array<i64: 2, 1>, scalar_prefetch = 0 : i64, scratch_operands = 0 : i64, tpu.core_type = #tpu.core_type<tc>, window_params = [{transform_indices = @transform_0, window_bounds = array<i64: 32, 1024>}, {transform_indices = @transform_1, window_bounds = array<i64: 32, 128>}]} {
    %c0_i32 = arith.constant 0 : i32
    %0 = arith.cmpi eq, %arg1, %c0_i32 : i32
    %1 = arith.extui %0 : i1 to i32
    %c0_i32_0 = arith.constant 0 : i32
    %2 = arith.cmpi ne, %1, %c0_i32_0 : i32
    scf.if %2 {
      %cst = arith.constant 0.000000e+00 : f32
      %21 = vector.broadcast %cst : f32 to vector<32x128xf32>
      %c0_13 = arith.constant 0 : index
      %c0_14 = arith.constant 0 : index
      %22 = vector.load %arg3[%c0_13, %c0_14] : memref<32x128xf32, #tpu.memory_space<vmem>>, vector<32x128xf32>
      tpu.vector_store %arg3[%c0_13, %c0_14], %21 {strides = array<i32>} : memref<32x128xf32, #tpu.memory_space<vmem>>, vector<32x128xf32>,
    } else {
    }
    %c0 = arith.constant 0 : index
    %c0_1 = arith.constant 0 : index
    %3 = vector.load %arg2[%c0, %c0_1] : memref<32x1024xf32, #tpu.memory_space<vmem>>, vector<32x128xf32>
    %c0_2 = arith.constant 0 : index
    %c128 = arith.constant 128 : index
    %4 = vector.load %arg2[%c0_2, %c128] : memref<32x1024xf32, #tpu.memory_space<vmem>>, vector<32x128xf32>
    %5 = arith.addf %3, %4 : vector<32x128xf32>
    %c0_3 = arith.constant 0 : index
    %c256 = arith.constant 256 : index
    %6 = vector.load %arg2[%c0_3, %c256] : memref<32x1024xf32, #tpu.memory_space<vmem>>, vector<32x128xf32>
    %7 = arith.addf %5, %6 : vector<32x128xf32>
    %c0_4 = arith.constant 0 : index
    %c384 = arith.constant 384 : index
    %8 = vector.load %arg2[%c0_4, %c384] : memref<32x1024xf32, #tpu.memory_space<vmem>>, vector<32x128xf32>
    %9 = arith.addf %7, %8 : vector<32x128xf32>
    %c0_5 = arith.constant 0 : index
    %c512 = arith.constant 512 : index
    %10 = vector.load %arg2[%c0_5, %c512] : memref<32x1024xf32, #tpu.memory_space<vmem>>, vector<32x128xf32>
    %11 = arith.addf %9, %10 : vector<32x128xf32>
    %c0_6 = arith.constant 0 : index
    %c640 = arith.constant 640 : index
    %12 = vector.load %arg2[%c0_6, %c640] : memref<32x1024xf32, #tpu.memory_space<vmem>>, vector<32x128xf32>
    %13 = arith.addf %11, %12 : vector<32x128xf32>
    %c0_7 = arith.constant 0 : index
    %c768 = arith.constant 768 : index
    %14 = vector.load %arg2[%c0_7, %c768] : memref<32x1024xf32, #tpu.memory_space<vmem>>, vector<32x128xf32>
    %15 = arith.addf %13, %14 : vector<32x128xf32>
    %c0_8 = arith.constant 0 : index
    %c896 = arith.constant 896 : index
    %16 = vector.load %arg2[%c0_8, %c896] : memref<32x1024xf32, #tpu.memory_space<vmem>>, vector<32x128xf32>
    %17 = arith.addf %15, %16 : vector<32x128xf32>
    %c0_9 = arith.constant 0 : index
    %c0_10 = arith.constant 0 : index
    %18 = vector.load %arg3[%c0_9, %c0_10] : memref<32x128xf32, #tpu.memory_space<vmem>>, vector<32x128xf32>
    %19 = arith.addf %18, %17 : vector<32x128xf32>
    %c0_11 = arith.constant 0 : index
    %c0_12 = arith.constant 0 : index
    %20 = vector.load %arg3[%c0_11, %c0_12] : memref<32x128xf32, #tpu.memory_space<vmem>>, vector<32x128xf32>
    tpu.vector_store %arg3[%c0_11, %c0_12], %19 {strides = array<i32>} : memref<32x128xf32, #tpu.memory_space<vmem>>, vector<32x128xf32>,
    return
  }
  func.func @transform_0(%arg0: i32, %arg1: i32) -> (i32, i32) {
    %c0_i32 = arith.constant 0 : i32
    return %arg0, %arg1 : i32, i32
  }
  func.func @transform_1(%arg0: i32, %arg1: i32) -> (i32, i32) {
    %c0_i32 = arith.constant 0 : i32
    %c0_i32_0 = arith.constant 0 : i32
    return %arg0, %c0_i32 : i32, i32
  }
}

</mosaic_0001>

<llo_original>
// kernel: tpu_custom_call.1
$region0: #{tpu_custom_call.1}
  #allocation0 [shape = 'u32[]', space=smem, size = 0x4, offset = 0x4, fixed_abs, tag = 'smem constant byte address 0x4 - core index']
  #allocation1 [shape = 'u32[144,128]{1,0:T(1,128)}', space=vmem, size = 0x12000, scoped, tag = 'internal scratch']
  %s0 = inlined_call_operand.hbm [shape: f32[64,1024], index: 0, kind: input, shape index: {}]
  %s1 = inlined_call_operand.hbm [shape: f32[64,128], index: 1, kind: output, shape index: {}]
  %s2 = sld [smem:[#allocation0]]
  $region45: #{tpu_custom_call.1} parent=0
    _
  %s4 = ssub.s32 1, %s2
  %s5 = scalar_select 0, %s4, %s2
  $region1: #{tpu_custom_call.1} parent=0
    #allocation2 [shape = 'u8[262144]{0}', space=vmem, size = 0x40000, scoped, tag = 'input window, operand 0']
    #allocation3 [shape = 's32[2]{0}', space=sflag, size = 0x8, scoped, tag = 'scoped memory for tpu_custom_call.1']
    #allocation4 [shape = 's32[2]{0}', space=sflag, size = 0x8, scoped, tag = 'scoped memory for tpu_custom_call.1']
    #allocation5 [shape = 'u8[32768]{0}', space=vmem, size = 0x8000, scoped, tag = 'output window, operand 0']
    %6 = vsyncpa [#allocation3], 0
    %s7 = scalar_lea.sflag [#allocation3], 1
    %8 = vsyncpa %s7, 0
    %9 = vsyncpa [#allocation4], 0
    %s10 = scalar_lea.sflag [#allocation4], 1
    %11 = vsyncpa %s10, 0
    loop: start=0, step=1, limit=4
    $region2: #{tpu_custom_call.1} parent=1 // loop_pre_header
      _
    $region3: #{tpu_custom_call.1} parent=1 // loop_header
      %s13 = sphi 0, %s17
      %p14 = scmp.ge.s32.totalorder %s13, 4
      %s20 = sphi 0, %s32
      %s21 = sphi 0, %s28
      %s22 = sphi 0, %s20
      %s23 = sphi 0, %s21
      %s24 = sphi 0, %s22
      %s25 = sphi 0, %s23
      %s37 = sphi 0, %s39
      %s40 = sphi 0, %s37
      %s41 = sphi 0, %s40
      %s57 = sphi 0, %s41
      %s63 = sphi 0, %s65
      %s66 = sphi 0, %s63
      %s67 = sphi 0, %s66
      %s83 = sphi 0, %s67
    $region4: #{tpu_custom_call.1} parent=1 // loop_header_branch
      %16 = sbr.rel (%p14) target = $region8
    $region5: #{tpu_custom_call.1} parent=1 // loop_body
      %s18 = ssub.s32 %s13, 1
      %s19 = ssub.s32 %s13, 2
      %s26 = sadd.s32 1, %s21
      %p27 = scmp.ge.s32.totalorder %s26, 1
      %s28 = scalar_select %p27, 0, %s26
      %s29 = sadd.s32 1, %s20
      %s30 = scalar_select %p27, %s29, %s20
      %p31 = scmp.ge.s32.totalorder %s30, 2
      %s32 = scalar_select %p31, 0, %s30
      %s33 = ssub.s32 %s20, %s32
      %s34 = ssub.s32 %s21, %s28
      %s35 = sor.u32 %s33, %s34
      %p36 = scmp.eq.s32.totalorder %s35, 0
      %s38 = sadd.s32 %s37, 1
      %s39 = scalar_select %p36, %s37, %s38
      %p42 = pneg %p36
      %p43 = scmp.eq.s32.totalorder %s13, 1
      %p44 = por %p42, %p43
      %p45 = scmp.ne.s32.totalorder %s37, %s40
      %p46 = scmp.eq.s32.totalorder %s13, 0
      %p47 = por %p45, %p46
      %p48 = scmp.ne.s32.totalorder %s37, %s40
      %p49 = scmp.eq.s32.totalorder %s18, 1
      %p50 = por %p48, %p49
      %p51 = scmp.ne.s32.totalorder %s40, %s41
      %p52 = scmp.eq.s32.totalorder %s18, 0
      %p53 = por %p51, %p52
      %p54 = scmp.ne.s32.totalorder %s40, %s41
      %p55 = scmp.eq.s32.totalorder %s19, 1
      %p56 = por %p54, %p55
      %p58 = scmp.ne.s32.totalorder %s41, %s57
      %p59 = scmp.eq.s32.totalorder %s19, 0
      %p60 = por %p58, %p59
      %s61 = ssub.s32 %s20, %s32
      %p62 = scmp.eq.s32.totalorder %s61, 0
      %s64 = sadd.s32 %s63, 1
      %s65 = scalar_select %p62, %s63, %s64
      %p68 = pneg %p62
      %p69 = scmp.eq.s32.totalorder %s13, 1
      %p70 = por %p68, %p69
      %p71 = scmp.ne.s32.totalorder %s63, %s66
      %p72 = scmp.eq.s32.totalorder %s13, 0
      %p73 = por %p71, %p72
      %p74 = scmp.ne.s32.totalorder %s63, %s66
      %p75 = scmp.eq.s32.totalorder %s18, 1
      %p76 = por %p74, %p75
      %p77 = scmp.ne.s32.totalorder %s66, %s67
      %p78 = scmp.eq.s32.totalorder %s18, 0
      %p79 = por %p77, %p78
      %p80 = scmp.ne.s32.totalorder %s66, %s67
      %p81 = scmp.eq.s32.totalorder %s19, 1
      %p82 = por %p80, %p81
      %p84 = scmp.ne.s32.totalorder %s67, %s83
      %p85 = scmp.eq.s32.totalorder %s19, 0
      %p86 = por %p84, %p85
      %p87 = scmp.le.s32.totalorder 1, %s13
      %p88 = scmp.lt.s32.totalorder %s13, 3
      %p89 = pnand %p87, %p88
      %p90 = pneg %p89
      // Predicated region
      $region9: #{tpu_custom_call.1} parent=5 // pred_check
        _
      $region10: #{tpu_custom_call.1} parent=5 // pred_check_branch
        %92 = sbr.rel (%p89) target = $region12
      $region11: #{tpu_custom_call.1} parent=5 // pred_region
        %s93 = ssub.s32 %s13, 1
      $region12: #{tpu_custom_call.1} parent=5 // pred_fallthru
        _
      %p94 = scmp.lt.s32.totalorder %s13, 2
      // Predicated region
      $region13: #{tpu_custom_call.1} parent=5 // pred_check
        %p95 = pneg %p94
      $region14: #{tpu_custom_call.1} parent=5 // pred_check_branch
        %97 = sbr.rel (%p95) target = $region16
      $region15: #{tpu_custom_call.1} parent=5 // pred_region
        // Predicated region
        $region17: #{tpu_custom_call.1} parent=15 // pred_check
          %p98 = pneg %p47
        $region18: #{tpu_custom_call.1} parent=15 // pred_check_branch
          %100 = sbr.rel (%p98) target = $region20
        $region19: #{tpu_custom_call.1} parent=15 // pred_region
          %s101 = sand.u32 %s37, 1
          %s102 = scalar_lea.sflag [#allocation3], %s101
          %s103 = sand.u32 %s37, 1
          %s104 = smul.addr %s103, 256
          %s105 = scalar_lea.vmem [#allocation2], %s104
          %s106 = smul.u32 4, %s20
          %s107 = smul.u32 8, %s21
          %s109 = ssub.s32 4096, 4096
          %110 = vsyncadd %s102, %s109
          %s111 = smul.addr %s106, 8
          %s112 = sadd.s32 %s107, %s111
          %s113 = smul.addr %s112, 128
          %s114 = scalar_lea.hbm %s0, %s113
          %s115 = sshll.u32 %s105, 4
          %s116 = int_to_ptr.vmem [resolvable:$true] %s115
          %121 = dma.hbm_to_vmem [thread:$0]  %s114, 4096, %s116, %s102, 1024, 1024, 64
        $region20: #{tpu_custom_call.1} parent=15 // pred_fallthru
          _
      $region16: #{tpu_custom_call.1} parent=5 // pred_fallthru
        _
      %p122 = scmp.le.s32.totalorder 1, %s13
      %p123 = scmp.lt.s32.totalorder %s13, 3
      %p124 = pnand %p122, %p123
      %p125 = pneg %p124
      // Predicated region
      $region21: #{tpu_custom_call.1} parent=5 // pred_check
        _
      $region22: #{tpu_custom_call.1} parent=5 // pred_check_branch
        %127 = sbr.rel (%p124) target = $region24
      $region23: #{tpu_custom_call.1} parent=5 // pred_region
        %s128 = ssub.s32 %s13, 1
        %s129 = sand.u32 %s40, 1
        %s130 = scalar_lea.sflag [#allocation3], %s129
        %s131 = sand.u32 %s40, 1
        %s132 = smul.addr %s131, 256
        %s133 = scalar_lea.vmem [#allocation2], %s132
        // Predicated region
        $region25: #{tpu_custom_call.1} parent=23 // pred_check
          %p134 = pneg %p53
        $region26: #{tpu_custom_call.1} parent=23 // pred_check_branch
          %136 = sbr.rel (%p134) target = $region28
        $region27: #{tpu_custom_call.1} parent=23 // pred_region
          %137 = dma.done %s130, 4096
        $region28: #{tpu_custom_call.1} parent=23 // pred_fallthru
          _
        %s138 = sand.u32 %s40, 1
        %s139 = scalar_lea.sflag [#allocation3], %s138
        %s140 = sand.u32 %s40, 1
        %s141 = smul.addr %s140, 256
        %s142 = scalar_lea.vmem [#allocation2], %s141
        %p143 = pneg %p53
        %p144 = pneg %p50
        %p145 = pneg %p79
        %p146 = pneg %p76
        %s147 = sand.u32 %s66, 1
        %s148 = scalar_lea.sflag [#allocation4], %s147
        %s149 = sand.u32 %s66, 1
        %s150 = smul.addr %s149, 32
        %s151 = scalar_lea.vmem [#allocation5], %s150
        %s152 = smul.u32 4, %s22
        %s153 = smul.u32 8, %s23
        %s154 = smul.u32 4, %s22
        %p155 = scmp.eq.s32.totalorder %s23, 0
        // Predicated region
        $region29: #{tpu_custom_call.1} parent=23 // pred_check
          %p156 = pneg %p155
        $region30: #{tpu_custom_call.1} parent=23 // pred_check_branch
          %158 = sbr.rel (%p156) target = $region32
        $region31: #{tpu_custom_call.1} parent=23 // pred_region
          %159 = vst [vmem:[%s151] sm:$0xff] 0.0
          %160 = vst [vmem:[%s151 + $0x8] sm:$0xff] 0.0
          %161 = vst [vmem:[%s151 + $0x10] sm:$0xff] 0.0
          %162 = vst [vmem:[%s151 + $0x18] sm:$0xff] 0.0
        $region32: #{tpu_custom_call.1} parent=23 // pred_fallthru
          _
        %v163 = vld [vmem:[%s133] sm:$0xff]
        %v164 = vld [vmem:[%s133 + $0x40] sm:$0xff]
        %v165 = vld [vmem:[%s133 + $0x80] sm:$0xff]
        %v166 = vld [vmem:[%s133 + $0xc0] sm:$0xff]
        %v167 = vld [vmem:[%s133 + $0x8] sm:$0xff]
        %v168 = vld [vmem:[%s133 + $0x48] sm:$0xff]
        %v169 = vld [vmem:[%s133 + $0x88] sm:$0xff]
        %v170 = vld [vmem:[%s133 + $0xc8] sm:$0xff]
        %v171 = vadd.f32 %v163, %v167
        %v172 = vadd.f32 %v164, %v168
        %v173 = vadd.f32 %v165, %v169
        %v174 = vadd.f32 %v166, %v170
        %v175 = vld [vmem:[%s133 + $0x10] sm:$0xff]
        %v176 = vld [vmem:[%s133 + $0x50] sm:$0xff]
        %v177 = vld [vmem:[%s133 + $0x90] sm:$0xff]
        %v178 = vld [vmem:[%s133 + $0xd0] sm:$0xff]
        %v179 = vadd.f32 %v171, %v175
        %v180 = vadd.f32 %v172, %v176
        %v181 = vadd.f32 %v173, %v177
        %v182 = vadd.f32 %v174, %v178
        %v183 = vld [vmem:[%s133 + $0x18] sm:$0xff]
        %v184 = vld [vmem:[%s133 + $0x58] sm:$0xff]
        %v185 = vld [vmem:[%s133 + $0x98] sm:$0xff]
        %v186 = vld [vmem:[%s133 + $0xd8] sm:$0xff]
        %v187 = vadd.f32 %v179, %v183
        %v188 = vadd.f32 %v180, %v184
        %v189 = vadd.f32 %v181, %v185
        %v190 = vadd.f32 %v182, %v186
        %v191 = vld [vmem:[%s133 + $0x20] sm:$0xff]
        %v192 = vld [vmem:[%s133 + $0x60] sm:$0xff]
        %v193 = vld [vmem:[%s133 + $0xa0] sm:$0xff]
        %v194 = vld [vmem:[%s133 + $0xe0] sm:$0xff]
        %v195 = vadd.f32 %v187, %v191
        %v196 = vadd.f32 %v188, %v192
        %v197 = vadd.f32 %v189, %v193
        %v198 = vadd.f32 %v190, %v194
        %v199 = vld [vmem:[%s133 + $0x28] sm:$0xff]
        %v200 = vld [vmem:[%s133 + $0x68] sm:$0xff]
        %v201 = vld [vmem:[%s133 + $0xa8] sm:$0xff]
        %v202 = vld [vmem:[%s133 + $0xe8] sm:$0xff]
        %v203 = vadd.f32 %v195, %v199
        %v204 = vadd.f32 %v196, %v200
        %v205 = vadd.f32 %v197, %v201
        %v206 = vadd.f32 %v198, %v202
        %v207 = vld [vmem:[%s133 + $0x30] sm:$0xff]
        %v208 = vld [vmem:[%s133 + $0x70] sm:$0xff]
        %v209 = vld [vmem:[%s133 + $0xb0] sm:$0xff]
        %v210 = vld [vmem:[%s133 + $0xf0] sm:$0xff]
        %v211 = vadd.f32 %v203, %v207
        %v212 = vadd.f32 %v204, %v208
        %v213 = vadd.f32 %v205, %v209
        %v214 = vadd.f32 %v206, %v210
        %v215 = vld [vmem:[%s133 + $0x38] sm:$0xff]
        %v216 = vld [vmem:[%s133 + $0x78] sm:$0xff]
        %v217 = vld [vmem:[%s133 + $0xb8] sm:$0xff]
        %v218 = vld [vmem:[%s133 + $0xf8] sm:$0xff]
        %v219 = vadd.f32 %v211, %v215
        %v220 = vadd.f32 %v212, %v216
        %v221 = vadd.f32 %v213, %v217
        %v222 = vadd.f32 %v214, %v218
        %v223 = vld [vmem:[%s151] sm:$0xff]
        %v224 = vld [vmem:[%s151 + $0x8] sm:$0xff]
        %v225 = vld [vmem:[%s151 + $0x10] sm:$0xff]
        %v226 = vld [vmem:[%s151 + $0x18] sm:$0xff]
        %v227 = vadd.f32 %v223, %v219
        %v228 = vadd.f32 %v224, %v220
        %v229 = vadd.f32 %v225, %v221
        %v230 = vadd.f32 %v226, %v222
        %231 = vst [vmem:[%s151] sm:$0xff] %v227
        %232 = vst [vmem:[%s151 + $0x8] sm:$0xff] %v228
        %233 = vst [vmem:[%s151 + $0x10] sm:$0xff] %v229
        %234 = vst [vmem:[%s151 + $0x18] sm:$0xff] %v230
        %s235 = sand.u32 %s66, 1
        %s236 = scalar_lea.sflag [#allocation4], %s235
        %s237 = sand.u32 %s66, 1
        %s238 = smul.addr %s237, 32
        %s239 = scalar_lea.vmem [#allocation5], %s238
        // Predicated region
        $region33: #{tpu_custom_call.1} parent=23 // pred_check
          %p240 = pneg %p76
        $region34: #{tpu_custom_call.1} parent=23 // pred_check_branch
          %242 = sbr.rel (%p240) target = $region36
        $region35: #{tpu_custom_call.1} parent=23 // pred_region
          %s243 = smul.u32 4, %s22
          %s245 = ssub.s32 512, 512
          %246 = vsyncadd %s236, %s245
          %s247 = smul.addr %s243, 128
          %s248 = scalar_lea.hbm %s1, %s247
          %s249 = sshll.u32 %s239, 4
          %s250 = int_to_ptr.vmem [resolvable:$true] %s249
          %255 = dma.vmem_to_hbm [thread:$0]  %s250, 512, %s248, %s236, 128, 128, 8
        $region36: #{tpu_custom_call.1} parent=23 // pred_fallthru
          _
      $region24: #{tpu_custom_call.1} parent=5 // pred_fallthru
        _
      %p256 = scmp.le.s32.totalorder 2, %s13
      // Predicated region
      $region37: #{tpu_custom_call.1} parent=5 // pred_check
        %p257 = pneg %p256
      $region38: #{tpu_custom_call.1} parent=5 // pred_check_branch
        %259 = sbr.rel (%p257) target = $region40
      $region39: #{tpu_custom_call.1} parent=5 // pred_region
        %s260 = ssub.s32 %s13, 2
        // Predicated region
        $region41: #{tpu_custom_call.1} parent=39 // pred_check
          %p261 = pneg %p82
        $region42: #{tpu_custom_call.1} parent=39 // pred_check_branch
          %263 = sbr.rel (%p261) target = $region44
        $region43: #{tpu_custom_call.1} parent=39 // pred_region
          %s264 = sand.u32 %s67, 1
          %s265 = scalar_lea.sflag [#allocation4], %s264
          %s266 = sand.u32 %s67, 1
          %s267 = smul.addr %s266, 32
          %s268 = scalar_lea.vmem [#allocation5], %s267
          %269 = dma.done %s265, 512
        $region44: #{tpu_custom_call.1} parent=39 // pred_fallthru
          _
      $region40: #{tpu_custom_call.1} parent=5 // pred_fallthru
        _
    $region6: #{tpu_custom_call.1} parent=1 // loop_footer
      %s17 = sadd.s32 1, %s13
    $region7: #{tpu_custom_call.1} parent=1 // loop_footer_branch
      %12 = sbr.rel target = $region3
    $region8: #{tpu_custom_call.1} parent=1 // loop_exit
      _
    %270 = vsyncpa [#allocation3], 1
    %s271 = scalar_lea.sflag [#allocation3], 1
    %272 = vsyncpa %s271, 1
    %273 = vsyncpa [#allocation4], 1
    %s274 = scalar_lea.sflag [#allocation4], 1
    %275 = vsyncpa %s274, 1

</llo_original>
